<compile_context>
chip_gen: v5e
topology: v5e:2x2
jax: 0.10.0
libtpu: 0.0.40
codegen_flags: <defaults>
</compile_context>

<pallas_src>
import functools

import jax
import jax.numpy as jnp
from jax.experimental import pallas as pl
from jax.experimental.pallas import tpu as pltpu


_LANE = 1024                        # lane-dense slab width (multiple of 128)
_MAX_TILE_ROWS = 512                # max sublane rows per block (multiple of 8)
_BLOCK_BYTES_BUDGET = 2 * 1024 * 1024
_VMEM_LIMIT_BYTES = 32 * 1024 * 1024


def _cdiv(a, b):
    return (a + b - 1) // b


def _round_up(x, m):
    return _cdiv(x, m) * m


def _row_tile(rows8, max_rows=_MAX_TILE_ROWS):
    """Largest row tile (multiple of 8, <= max_rows) tiling rows8 with little padding."""
    if rows8 <= max_rows:
        return rows8
    n_blocks = _cdiv(rows8, max_rows)
    return _round_up(_cdiv(rows8, n_blocks), 8)


# ----------------------------------------------------------------------------
# Kernels
# ----------------------------------------------------------------------------
def _bce_sum_kernel(x_ref, y_ref, out_ref, *, n_valid, n_steps):
    p = pl.program_id(0)
    t = pl.program_id(1)

    @pl.when(t == 0)
    def _init():
        out_ref[...] = jnp.zeros_like(out_ref)

    x = x_ref[...].astype(jnp.float32)
    y = y_ref[...].astype(jnp.float32)
    # Numerically stable BCEWithLogits (same formula PyTorch uses):
    #   l(x, y) = max(x, 0) - x*y + log(1 + exp(-|x|))
    loss = jnp.maximum(x, 0.0) - x * y + jnp.log1p(jnp.exp(-jnp.abs(x)))

    # Mask padded tail elements of the lane-dense slab (flat index >= n_valid).
    rows, lanes = x.shape
    base = (p * n_steps + t) * (rows * lanes)
    flat_idx = (base
                + jax.lax.broadcasted_iota(jnp.int32, (rows, lanes), 0) * lanes
                + jax.lax.broadcasted_iota(jnp.int32, (rows, lanes), 1))
    loss = jnp.where(flat_idx < n_valid, loss, 0.0)

    # Running sum, broadcast over the vreg-aligned (1, 8, 128) partial block.
    out_ref[...] += jnp.sum(loss)


def _ce_sum_kernel(x_ref, lbl_ref, out_ref, *, n_valid_rows, n_steps):
    p = pl.program_id(0)
    t = pl.program_id(1)

    @pl.when(t == 0)
    def _init():
        out_ref[...] = jnp.zeros_like(out_ref)

    x = x_ref[...].astype(jnp.float32)      # (TB, C)
    lbl = lbl_ref[...]                      # (TB, 1) int32
    rows, ncls = x.shape

    m = jnp.max(x, axis=-1, keepdims=True)                              # (TB, 1)
    lse = m + jnp.log(jnp.sum(jnp.exp(x - m), axis=-1, keepdims=True))  # (TB, 1)
    # One-hot gather of x[i, lbl[i]].
    # TODO(synk): labels outside [0, C) silently contribute picked=0 here,
    # whereas PyTorch raises; add a debug_check/clamp if that matters.
    class_ids = jax.lax.broadcasted_iota(jnp.int32, (rows, ncls), 1)
    picked = jnp.sum(jnp.where(class_ids == lbl, x, 0.0), axis=-1, keepdims=True)
    per_row = lse - picked                                              # (TB, 1)

    # Mask padded batch rows.
    base = (p * n_steps + t) * rows
    row_ids = base + jax.lax.broadcasted_iota(jnp.int32, (rows, 1), 0)
    per_row = jnp.where(row_ids < n_valid_rows, per_row, 0.0)

    out_ref[...] += jnp.sum(per_row)


# ----------------------------------------------------------------------------
# Wrappers
# ----------------------------------------------------------------------------
def _bce_partial_sums(logits, labels):
    """Per-parallel-chunk sums of elementwise BCE-with-logits losses."""
    if logits.shape != labels.shape:
        raise ValueError(f"Shape mismatch: {logits.shape} vs {labels.shape}")
    n = int(logits.size)                      # static at trace time
    rows = max(1, _cdiv(n, _LANE))
    rows8 = _round_up(rows, 8)
    tr = _row_tile(rows8)
    n_blocks = _cdiv(rows8, tr)
    n_par = 2 if n_blocks >= 2 else 1         # v7x: split across both TensorCores
    n_steps = _cdiv(n_blocks, n_par)
    rows_pad = n_par * n_steps * tr
    n_pad = rows_pad * _LANE

    def _slab(a):
        flat = a.reshape(-1)
        if n_pad != n:
            flat = jnp.pad(flat, (0, n_pad - n))
        return flat.reshape(rows_pad, _LANE)  # lane-dense layout

    kernel = functools.partial(_bce_sum_kernel, n_valid=n, n_steps=n_steps)
    out = pl.pallas_call(
        kernel,
        out_shape=jax.ShapeDtypeStruct((n_par, 8, 128), jnp.float32),
        grid=(n_par, n_steps),
        in_specs=[
            pl.BlockSpec((tr, _LANE), lambda p, t: (p * n_steps + t, 0)),
            pl.BlockSpec((tr, _LANE), lambda p, t: (p * n_steps + t, 0)),
        ],
        out_specs=pl.BlockSpec((1, 8, 128), lambda p, t: (p, 0, 0)),
        compiler_params=pltpu.CompilerParams(
            dimension_semantics=("parallel", "arbitrary"),
            vmem_limit_bytes=_VMEM_LIMIT_BYTES,
        ),
    )(_slab(logits), _slab(labels))
    return out[:, 0, 0], n


def _ce_partial_sums(logits, labels):
    """Per-parallel-chunk sums of per-row softmax cross-entropy losses."""
    b, c = logits.shape
    itemsize = jnp.dtype(logits.dtype).itemsize
    # Keep one logits block around ~2 MiB (x2 inputs x2 pipeline buffers << VMEM).
    rows_fit = max(8, (_BLOCK_BYTES_BUDGET // max(1, c * itemsize)) // 8 * 8)
    tb = max(8, min(_MAX_TILE_ROWS, _round_up(b, 8), rows_fit))
    # TODO(synk): tile over the class axis with an online logsumexp for vocab-sized C.
    n_blocks = _cdiv(b, tb)
    n_par = 2 if n_blocks >= 2 else 1
    n_steps = _cdiv(n_blocks, n_par)
    b_pad = n_par * n_steps * tb

    x = logits
    lbl = labels.astype(jnp.int32)
    if b_pad != b:
        x = jnp.pad(x, ((0, b_pad - b), (0, 0)))
        lbl = jnp.pad(lbl, (0, b_pad - b))
    lbl2d = lbl.reshape(b_pad, 1)

    kernel = functools.partial(_ce_sum_kernel, n_valid_rows=b, n_steps=n_steps)
    out = pl.pallas_call(
        kernel,
        out_shape=jax.ShapeDtypeStruct((n_par, 8, 128), jnp.float32),
        grid=(n_par, n_steps),
        in_specs=[
            pl.BlockSpec((tb, c), lambda p, t: (p * n_steps + t, 0)),
            pl.BlockSpec((tb, 1), lambda p, t: (p * n_steps + t, 0)),
        ],
        out_specs=pl.BlockSpec((1, 8, 128), lambda p, t: (p, 0, 0)),
        compiler_params=pltpu.CompilerParams(
            dimension_semantics=("parallel", "arbitrary"),
            vmem_limit_bytes=_VMEM_LIMIT_BYTES,
        ),
    )(x, lbl2d)
    return out[:, 0, 0], b


@jax.jit
def bce_with_logits_loss(logits, labels):
    partial_sums, n = _bce_partial_sums(logits, labels)
    return jnp.sum(partial_sums) * jnp.float32(1.0 / n)   # single divide


@jax.jit
def cross_entropy_loss(logits, labels):
    partial_sums, b = _ce_partial_sums(logits, labels)
    return jnp.sum(partial_sums) * jnp.float32(1.0 / b)   # single divide


class CrossBCEWithLogitsLoss:
    """JAX/Pallas port of the PyTorch CrossBCEWithLogitsLoss module."""

    def __init__(self, dataset_dict, config_dict):
        del dataset_dict  # unused, kept for signature parity
        self.bce_weights = float(config_dict["bce_weight"])
        self.ce_weights = 1.0 - self.bce_weights

    def __call__(self, logits_dict, labels_dict, task_configs):
        # TODO(synk): fuse all same-type tasks into a single pallas_call (task
        # grid axis + per-task partial-sum outputs) to amortize launch overhead
        # when there are many tiny heads.
        total_loss = jnp.float32(0.0)
        for config in task_configs:
            task_name = config["name"]
            loss_type = config["type"]
            if task_name not in logits_dict or task_name not in labels_dict:
                raise ValueError(
                    f"Task {task_name} not found in logits_dict or labels_dict")
            logits = logits_dict[task_name]
            labels = labels_dict[task_name]
            if loss_type == "bce":
                loss = bce_with_logits_loss(logits, labels)
                weight = self.bce_weights
            elif loss_type == "ce":
                if logits.ndim == 2 and labels.ndim == 1:
                    loss = cross_entropy_loss(logits, labels)
                    weight = self.ce_weights
                else:
                    raise ValueError(
                        f"Invalid shape for CE loss: logits {logits.shape}, "
                        f"labels {labels.shape}")
            else:
                raise ValueError(f"Unsupported loss type: {loss_type}")
            total_loss = total_loss + weight * loss
        return total_loss


# ----------------------------------------------------------------------------
# Pure-JAX reference (silent sanity check)
# ----------------------------------------------------------------------------
def _ref_total(logits_dict, labels_dict, task_configs, bce_w):
    total = 0.0
    for cfg in task_configs:
        x = logits_dict[cfg["name"]].astype(jnp.float32)
        y = labels_dict[cfg["name"]]
        if cfg["type"] == "bce":
            y = y.astype(jnp.float32)
            l = jnp.mean(jnp.maximum(x, 0) - x * y + jnp.log1p(jnp.exp(-jnp.abs(x))))
            total = total + bce_w * l
        else:
            lse = jax.nn.logsumexp(x, axis=-1)
            picked = jnp.take_along_axis(x, y.astype(jnp.int32)[:, None], axis=-1)[:, 0]
            total = total + (1.0 - bce_w) * jnp.mean(lse - picked)
    return total


if __name__ == "__main__":
    key = jax.random.PRNGKey(0)
    k1, k2, k3, k4, k5, k6 = jax.random.split(key, 6)

    # Tiny recsys-style BCE head.
    B, F = 8, 16
    bce_logits = jax.random.normal(k1, (B, F), dtype=jnp.float32)
    bce_labels = (jax.random.uniform(k2, (B, F)) > 0.5).astype(jnp.float32)

    # bf16 BCE head, large enough to exercise the tiled multi-block grid,
    # the "parallel" axis and tail-element masking.
    B2, F2 = 600, 1024
    bce2_logits = jax.random.normal(k3, (B2, F2)).astype(jnp.bfloat16)
    bce2_labels = (jax.random.uniform(k4, (B2, F2)) > 0.5).astype(jnp.bfloat16)

    # CE head: exercises batch tiling (4 blocks, 2 parallel chunks) and
    # masked padded rows.
    B3, C3 = 1040, 16
    ce_logits = jax.random.normal(k5, (B3, C3), dtype=jnp.float32)
    ce_labels = jax.random.randint(k6, (B3,), 0, C3, dtype=jnp.int32)

    logits_dict = {"click": bce_logits, "watch": bce2_logits, "category": ce_logits}
    labels_dict = {"click": bce_labels, "watch": bce2_labels, "category": ce_labels}
    task_configs = [
        {"name": "click", "type": "bce", "weight": 1.0},
        {"name": "watch", "type": "bce", "weight": 1.0},
        {"name": "category", "type": "ce", "weight": 1.0},
    ]
    config_dict = {"bce_weight": 0.6}

    loss_fn = CrossBCEWithLogitsLoss(dataset_dict={}, config_dict=config_dict)
    total = loss_fn(logits_dict, labels_dict, task_configs)
    total = jax.block_until_ready(total)

    ref = _ref_total(logits_dict, labels_dict, task_configs, config_dict["bce_weight"])
    assert jnp.allclose(total, ref, rtol=1e-4, atol=1e-4), (total, ref)

    print("KERNEL_OK")
</pallas_src>

<mosaic_0001>
module attributes {stable_mosaic.version = 11 : i64} {
  func.func @_bce_sum_kernel(%arg0: i32, %arg1: i32, %arg2: memref<8x1024xf32, #tpu.memory_space<vmem>>, %arg3: memref<8x1024xf32, #tpu.memory_space<vmem>>, %arg4: memref<1x8x128xf32, #tpu.memory_space<vmem>>) attributes {dimension_semantics = [#tpu.dimension_semantics<parallel>, #tpu.dimension_semantics<arbitrary>], iteration_bounds = array<i64: 1, 1>, scalar_prefetch = 0 : i64, scratch_operands = 0 : i64, tpu.core_type = #tpu.core_type<tc>, window_params = [{transform_indices = @transform_0, window_bounds = array<i64: 8, 1024>}, {transform_indices = @transform_1, window_bounds = array<i64: 8, 1024>}, {transform_indices = @transform_2, window_bounds = array<i64: 1, 8, 128>}]} {
    %c0_i32 = arith.constant 0 : i32
    %0 = arith.cmpi eq, %arg1, %c0_i32 : i32
    %1 = arith.extui %0 : i1 to i32
    %c0_i32_0 = arith.constant 0 : i32
    %2 = arith.cmpi ne, %1, %c0_i32_0 : i32
    scf.if %2 {
      %cst_13 = arith.constant 0.000000e+00 : f32
      %37 = vector.broadcast %cst_13 : f32 to vector<1x8x128xf32>
      %c0_14 = arith.constant 0 : index
      %c0_15 = arith.constant 0 : index
      %c0_16 = arith.constant 0 : index
      %38 = vector.load %arg4[%c0_14, %c0_15, %c0_16] : memref<1x8x128xf32, #tpu.memory_space<vmem>>, vector<1x8x128xf32>
      tpu.vector_store %arg4[%c0_14, %c0_15, %c0_16], %37 {strides = array<i32>} : memref<1x8x128xf32, #tpu.memory_space<vmem>>, vector<1x8x128xf32>,
    } else {
    }
    %c0 = arith.constant 0 : index
    %c0_1 = arith.constant 0 : index
    %3 = vector.load %arg2[%c0, %c0_1] : memref<8x1024xf32, #tpu.memory_space<vmem>>, vector<8x1024xf32>
    %c0_2 = arith.constant 0 : index
    %c0_3 = arith.constant 0 : index
    %4 = vector.load %arg3[%c0_2, %c0_3] : memref<8x1024xf32, #tpu.memory_space<vmem>>, vector<8x1024xf32>
    %cst = arith.constant 0.000000e+00 : f32
    %5 = vector.broadcast %cst : f32 to vector<8x1024xf32>
    %6 = arith.maximumf %3, %5 : vector<8x1024xf32>
    %7 = arith.mulf %3, %4 : vector<8x1024xf32>
    %8 = arith.subf %6, %7 : vector<8x1024xf32>
    %9 = math.absf %3 : vector<8x1024xf32>
    %cst_4 = arith.constant 0.000000e+00 : f32
    %10 = vector.broadcast %cst_4 : f32 to vector<8x1024xf32>
    %11 = arith.subf %10, %9 : vector<8x1024xf32>
    %12 = math.exp %11 : vector<8x1024xf32>
    %13 = math.log1p %12 : vector<8x1024xf32>
    %14 = arith.addf %8, %13 : vector<8x1024xf32>
    %c1_i32 = arith.constant 1 : i32
    %15 = arith.muli %arg0, %c1_i32 : i32
    %16 = arith.addi %15, %arg1 : i32
    %c8192_i32 = arith.constant 8192 : i32
    %17 = arith.muli %16, %c8192_i32 : i32
    %18 = tpu.iota {dimensions = array<i32: 0>} : vector<8x1024xi32>
    %c1024_i32 = arith.constant 1024 : i32
    %19 = vector.broadcast %c1024_i32 : i32 to vector<8x1024xi32>
    %20 = arith.muli %18, %19 : vector<8x1024xi32>
    %21 = vector.broadcast %17 : i32 to vector<8x1024xi32>
    %22 = arith.addi %21, %20 : vector<8x1024xi32>
    %23 = tpu.iota {dimensions = array<i32: 1>} : vector<8x1024xi32>
    %24 = arith.addi %22, %23 : vector<8x1024xi32>
    %c128_i32 = arith.constant 128 : i32
    %25 = vector.broadcast %c128_i32 : i32 to vector<8x1024xi32>
    %26 = arith.cmpi slt, %24, %25 : vector<8x1024xi32>
    %cst_5 = arith.constant 0.000000e+00 : f32
    %27 = vector.broadcast %cst_5 : f32 to vector<8x1024xf32>
    %28 = arith.select %26, %14, %27 : vector<8x1024xi1>, vector<8x1024xf32>
    %c0_6 = arith.constant 0 : index
    %c0_7 = arith.constant 0 : index
    %c0_8 = arith.constant 0 : index
    %29 = vector.load %arg4[%c0_6, %c0_7, %c0_8] : memref<1x8x128xf32, #tpu.memory_space<vmem>>, vector<1x8x128xf32>
    %30 = vector.shape_cast %28 : vector<8x1024xf32> to vector<1x8x1024xf32>
    %cst_9 = arith.constant dense<0.000000e+00> : vector<1xf32>
    %31 = vector.multi_reduction <add>, %30, %cst_9 [1, 2] : vector<1x8x1024xf32> to vector<1xf32>
    %32 = vector.shape_cast %31 : vector<1xf32> to vector<1x1x1xf32>
    %33 = vector.extract %32[0, 0, 0] : f32 from vector<1x1x1xf32>
    %34 = vector.broadcast %33 : f32 to vector<1x8x128xf32>
    %35 = arith.addf %29, %34 : vector<1x8x128xf32>
    %c0_10 = arith.constant 0 : index
    %c0_11 = arith.constant 0 : index
    %c0_12 = arith.constant 0 : index
    %36 = vector.load %arg4[%c0_10, %c0_11, %c0_12] : memref<1x8x128xf32, #tpu.memory_space<vmem>>, vector<1x8x128xf32>
    tpu.vector_store %arg4[%c0_10, %c0_11, %c0_12], %35 {strides = array<i32>} : memref<1x8x128xf32, #tpu.memory_space<vmem>>, vector<1x8x128xf32>,
    return
  }
  func.func @transform_0(%arg0: i32, %arg1: i32) -> (i32, i32) {
    %c1_i32 = arith.constant 1 : i32
    %0 = arith.muli %arg0, %c1_i32 : i32
    %1 = arith.addi %0, %arg1 : i32
    %c0_i32 = arith.constant 0 : i32
    %c0_i32_0 = arith.constant 0 : i32
    return %1, %c0_i32 : i32, i32
  }
  func.func @transform_1(%arg0: i32, %arg1: i32) -> (i32, i32) {
    %c1_i32 = arith.constant 1 : i32
    %0 = arith.muli %arg0, %c1_i32 : i32
    %1 = arith.addi %0, %arg1 : i32
    %c0_i32 = arith.constant 0 : i32
    %c0_i32_0 = arith.constant 0 : i32
    return %1, %c0_i32 : i32, i32
  }
  func.func @transform_2(%arg0: i32, %arg1: i32) -> (i32, i32, i32) {
    %c0_i32 = arith.constant 0 : i32
    %c0_i32_0 = arith.constant 0 : i32
    %c0_i32_1 = arith.constant 0 : i32
    return %arg0, %c0_i32, %c0_i32_0 : i32, i32, i32
  }
}

</mosaic_0001>

<llo_original>
// kernel: bce_with_logits_loss.1
$region0: #{bce_with_logits_loss.1}
  #allocation0 [shape = 'u32[]', space=smem, size = 0x4, offset = 0x4, fixed_abs, tag = 'smem constant byte address 0x4 - core index']
  #allocation1 [shape = 'u32[72,128]{1,0:T(1,128)}', space=vmem, size = 0x9000, scoped, tag = 'internal scratch']
  %s0 = inlined_call_operand.vmem [shape: f32[8,1024], index: 0, kind: input, shape index: {}]
  %s1 = inlined_call_operand.vmem [shape: f32[8,1024], index: 1, kind: input, shape index: {}]
  %s2 = inlined_call_operand.vmem [shape: f32[1,8,128], index: 2, kind: output, shape index: {}]
  %s3 = sld [smem:[#allocation0]]
  $region22: #{bce_with_logits_loss.1} parent=0
    _
  %s5 = ssub.s32 1, %s3
  %s6 = scalar_select 0, %s5, %s3
  // Predicated region
  $region2: #{bce_with_logits_loss.1} parent=0 // pred_check
    _
  $region3: #{bce_with_logits_loss.1} parent=0 // pred_check_branch
    %8 = sbr.rel (0) target = $region5
  $region4: #{bce_with_logits_loss.1} parent=0 // pred_region
    %s9 = sadd.s32 0, 0
    %p10 = scmp.lt.s32.totalorder %s9, 0
    %s11 = scalar_select %p10, %s9, 0
    %s12 = smul.addr %s11, 8
    %s13 = smul.addr %s12, 8
    %s14 = scalar_lea.vmem %s0, %s13
    %s15 = sadd.s32 0, 0
  $region5: #{bce_with_logits_loss.1} parent=0 // pred_fallthru
    _
  // Predicated region
  $region6: #{bce_with_logits_loss.1} parent=0 // pred_check
    _
  $region7: #{bce_with_logits_loss.1} parent=0 // pred_check_branch
    %17 = sbr.rel (0) target = $region9
  $region8: #{bce_with_logits_loss.1} parent=0 // pred_region
    %s18 = sadd.s32 0, 0
    %p19 = scmp.lt.s32.totalorder %s18, 0
    %s20 = scalar_select %p19, %s18, 0
    %s21 = smul.addr %s20, 8
    %s22 = smul.addr %s21, 8
    %s23 = scalar_lea.vmem %s1, %s22
    %s24 = sadd.s32 0, 0
  $region9: #{bce_with_logits_loss.1} parent=0 // pred_fallthru
    _
  %s25 = sadd.s32 0, 0
  %p26 = scmp.lt.s32.totalorder %s25, 0
  %s27 = scalar_select %p26, %s25, 0
  %s28 = smul.addr %s27, 8
  %s29 = smul.addr %s28, 8
  %s30 = scalar_lea.vmem %s0, %s29
  %s31 = sadd.s32 0, 0
  %p32 = scmp.lt.s32.totalorder %s31, 0
  %s33 = scalar_select %p32, %s31, 0
  %s34 = smul.addr %s33, 8
  %s35 = smul.addr %s34, 8
  %s36 = scalar_lea.vmem %s1, %s35
  %s37 = sadd.s32 0, 0
  %p38 = scmp.lt.s32.totalorder %s37, 0
  %s39 = scalar_select %p38, %s37, 0
  %s40 = smul.addr %s39, 8
  %s41 = smul.addr %s40, 8
  %s42 = scalar_lea.vmem %s0, %s41
  %s43 = sadd.s32 0, 0
  %s44 = sadd.s32 0, 0
  %p45 = scmp.lt.s32.totalorder %s44, 0
  %s46 = scalar_select %p45, %s44, 0
  %s47 = smul.addr %s46, 8
  %s48 = smul.addr %s47, 8
  %s49 = scalar_lea.vmem %s1, %s48
  %s50 = sadd.s32 0, 0
  %p51 = scmp.eq.s32.totalorder 0, 0
  // Predicated region
  $region10: #{bce_with_logits_loss.1} parent=0 // pred_check
    %p52 = pneg %p51
  $region11: #{bce_with_logits_loss.1} parent=0 // pred_check_branch
    %54 = sbr.rel (%p52) target = $region13
  $region12: #{bce_with_logits_loss.1} parent=0 // pred_region
    %55 = vst [vmem:[%s2] sm:$0xff] 0.0
  $region13: #{bce_with_logits_loss.1} parent=0 // pred_fallthru
    _
  %v56 = vld [vmem:[%s42] sm:$0xff]
  %v57 = vld [vmem:[%s42 + $0x8] sm:$0xff]
  %v58 = vld [vmem:[%s42 + $0x10] sm:$0xff]
  %v59 = vld [vmem:[%s42 + $0x18] sm:$0xff]
  %v60 = vld [vmem:[%s42 + $0x20] sm:$0xff]
  %v61 = vld [vmem:[%s42 + $0x28] sm:$0xff]
  %v62 = vld [vmem:[%s42 + $0x30] sm:$0xff]
  %v63 = vld [vmem:[%s42 + $0x38] sm:$0xff]
  %v64 = vld [vmem:[%s49] sm:$0xff]
  %v65 = vld [vmem:[%s49 + $0x8] sm:$0xff]
  %v66 = vld [vmem:[%s49 + $0x10] sm:$0xff]
  %v67 = vld [vmem:[%s49 + $0x18] sm:$0xff]
  %v68 = vld [vmem:[%s49 + $0x20] sm:$0xff]
  %v69 = vld [vmem:[%s49 + $0x28] sm:$0xff]
  %v70 = vld [vmem:[%s49 + $0x30] sm:$0xff]
  %v71 = vld [vmem:[%s49 + $0x38] sm:$0xff]
  %v72 = vmax.f32 %v56, 0.0
  %v73 = vmax.f32 %v57, 0.0
  %v74 = vmax.f32 %v58, 0.0
  %v75 = vmax.f32 %v59, 0.0
  %v76 = vmax.f32 %v60, 0.0
  %v77 = vmax.f32 %v61, 0.0
  %v78 = vmax.f32 %v62, 0.0
  %v79 = vmax.f32 %v63, 0.0
  %v80 = vmul.f32 %v56, %v64
  %v81 = vmul.f32 %v57, %v65
  %v82 = vmul.f32 %v58, %v66
  %v83 = vmul.f32 %v59, %v67
  %v84 = vmul.f32 %v60, %v68
  %v85 = vmul.f32 %v61, %v69
  %v86 = vmul.f32 %v62, %v70
  %v87 = vmul.f32 %v63, %v71
  %v88 = vsub.f32 %v72, %v80
  %v89 = vsub.f32 %v73, %v81
  %v90 = vsub.f32 %v74, %v82
  %v91 = vsub.f32 %v75, %v83
  %v92 = vsub.f32 %v76, %v84
  %v93 = vsub.f32 %v77, %v85
  %v94 = vsub.f32 %v78, %v86
  %v95 = vsub.f32 %v79, %v87
  %v96 = vand.u32 2147483647, %v56
  %v97 = vand.u32 2147483647, %v57
  %v98 = vand.u32 2147483647, %v58
  %v99 = vand.u32 2147483647, %v59
  %v100 = vand.u32 2147483647, %v60
  %v101 = vand.u32 2147483647, %v61
  %v102 = vand.u32 2147483647, %v62
  %v103 = vand.u32 2147483647, %v63
  %v104 = vsub.f32 0.0, %v96
  %v105 = vsub.f32 0.0, %v97
  %v106 = vsub.f32 0.0, %v98
  %v107 = vsub.f32 0.0, %v99
  %v108 = vsub.f32 0.0, %v100
  %v109 = vsub.f32 0.0, %v101
  %v110 = vsub.f32 0.0, %v102
  %v111 = vsub.f32 0.0, %v103
  %v112 = vmul.f32 %v104, 1.442695
  %v113 = vpow.pop %v112
  %v114 = vmul.f32 %v105, 1.442695
  %v115 = vpow.pop %v114
  %v116 = vmul.f32 %v106, 1.442695
  %v117 = vpow.pop %v116
  %v118 = vmul.f32 %v107, 1.442695
  %v119 = vpow.pop %v118
  %v120 = vmul.f32 %v108, 1.442695
  %v121 = vpow.pop %v120
  %v122 = vmul.f32 %v109, 1.442695
  %v123 = vpow.pop %v122
  %v124 = vmul.f32 %v110, 1.442695
  %v125 = vpow.pop %v124
  %v126 = vmul.f32 %v111, 1.442695
  %v127 = vpow.pop %v126
  %v128 = vadd.f32 %v113, 1.0
  %v129 = vlog2.pop %v128
  %v130 = vmul.f32 %v129, 0.6931472
  %v131 = vmul.f32 -0.5, %v113
  %v132 = vadd.f32 %v131, 1.0
  %v133 = vmul.f32 %v132, %v113
  %v134 = vand.u32 2147483647, %v113
  %vm135 = vcmp.lt.f32.partialorder %v134, 0.0004427343
  %v136 = vsel %vm135, %v133, %v130
  %v137 = vadd.f32 %v115, 1.0
  %v138 = vlog2.pop %v137
  %v139 = vmul.f32 %v138, 0.6931472
  %v140 = vmul.f32 -0.5, %v115
  %v141 = vadd.f32 %v140, 1.0
  %v142 = vmul.f32 %v141, %v115
  %v143 = vand.u32 2147483647, %v115
  %vm144 = vcmp.lt.f32.partialorder %v143, 0.0004427343
  %v145 = vsel %vm144, %v142, %v139
  %v146 = vadd.f32 %v117, 1.0
  %v147 = vlog2.pop %v146
  %v148 = vmul.f32 %v147, 0.6931472
  %v149 = vmul.f32 -0.5, %v117
  %v150 = vadd.f32 %v149, 1.0
  %v151 = vmul.f32 %v150, %v117
  %v152 = vand.u32 2147483647, %v117
  %vm153 = vcmp.lt.f32.partialorder %v152, 0.0004427343
  %v154 = vsel %vm153, %v151, %v148
  %v155 = vadd.f32 %v119, 1.0
  %v156 = vlog2.pop %v155
  %v157 = vmul.f32 %v156, 0.6931472
  %v158 = vmul.f32 -0.5, %v119
  %v159 = vadd.f32 %v158, 1.0
  %v160 = vmul.f32 %v159, %v119
  %v161 = vand.u32 2147483647, %v119
  %vm162 = vcmp.lt.f32.partialorder %v161, 0.0004427343
  %v163 = vsel %vm162, %v160, %v157
  %v164 = vadd.f32 %v121, 1.0
  %v165 = vlog2.pop %v164
  %v166 = vmul.f32 %v165, 0.6931472
  %v167 = vmul.f32 -0.5, %v121
  %v168 = vadd.f32 %v167, 1.0
  %v169 = vmul.f32 %v168, %v121
  %v170 = vand.u32 2147483647, %v121
  %vm171 = vcmp.lt.f32.partialorder %v170, 0.0004427343
  %v172 = vsel %vm171, %v169, %v166
  %v173 = vadd.f32 %v123, 1.0
  %v174 = vlog2.pop %v173
  %v175 = vmul.f32 %v174, 0.6931472
  %v176 = vmul.f32 -0.5, %v123
  %v177 = vadd.f32 %v176, 1.0
  %v178 = vmul.f32 %v177, %v123
  %v179 = vand.u32 2147483647, %v123
  %vm180 = vcmp.lt.f32.partialorder %v179, 0.0004427343
  %v181 = vsel %vm180, %v178, %v175
  %v182 = vadd.f32 %v125, 1.0
  %v183 = vlog2.pop %v182
  %v184 = vmul.f32 %v183, 0.6931472
  %v185 = vmul.f32 -0.5, %v125
  %v186 = vadd.f32 %v185, 1.0
  %v187 = vmul.f32 %v186, %v125
  %v188 = vand.u32 2147483647, %v125
  %vm189 = vcmp.lt.f32.partialorder %v188, 0.0004427343
  %v190 = vsel %vm189, %v187, %v184
  %v191 = vadd.f32 %v127, 1.0
  %v192 = vlog2.pop %v191
  %v193 = vmul.f32 %v192, 0.6931472
  %v194 = vmul.f32 -0.5, %v127
  %v195 = vadd.f32 %v194, 1.0
  %v196 = vmul.f32 %v195, %v127
  %v197 = vand.u32 2147483647, %v127
  %vm198 = vcmp.lt.f32.partialorder %v197, 0.0004427343
  %v199 = vsel %vm198, %v196, %v193
  %v200 = vadd.f32 %v88, %v136
  %v201 = vadd.f32 %v89, %v145
  %v202 = vadd.f32 %v90, %v154
  %v203 = vadd.f32 %v91, %v163
  %v204 = vadd.f32 %v92, %v172
  %v205 = vadd.f32 %v93, %v181
  %v206 = vadd.f32 %v94, %v190
  %v207 = vadd.f32 %v95, %v199
  %s208 = sadd.s32 0, 0
  %s209 = smul.u32 %s208, 8192
  %v210 = vlaneseq
  %v211 = vshrl.u32 %v210, 7
  %v212 = vmul.u32 %v211, 1024
  %v213 = vstv %s209
  %v214 = vadd.s32 %v213, %v212
  %v215 = vlaneseq
  %v216 = vand.u32 %v215, 127
  %v217 = vadd.s32 %v216, 128
  %v218 = vadd.s32 %v216, 256
  %v219 = vadd.s32 %v216, 384
  %v220 = vadd.s32 %v216, 512
  %v221 = vadd.s32 %v216, 640
  %v222 = vadd.s32 %v216, 768
  %v223 = vadd.s32 %v216, 896
  %v224 = vadd.s32 %v214, %v216
  %v225 = vadd.s32 %v214, %v217
  %v226 = vadd.s32 %v214, %v218
  %v227 = vadd.s32 %v214, %v219
  %v228 = vadd.s32 %v214, %v220
  %v229 = vadd.s32 %v214, %v221
  %v230 = vadd.s32 %v214, %v222
  %v231 = vadd.s32 %v214, %v223
  %vm232 = vcmp.lt.s32.totalorder %v224, 128
  %vm233 = vcmp.lt.s32.totalorder %v225, 128
  %vm234 = vcmp.lt.s32.totalorder %v226, 128
  %vm235 = vcmp.lt.s32.totalorder %v227, 128
  %vm236 = vcmp.lt.s32.totalorder %v228, 128
  %vm237 = vcmp.lt.s32.totalorder %v229, 128
  %vm238 = vcmp.lt.s32.totalorder %v230, 128
  %vm239 = vcmp.lt.s32.totalorder %v231, 128
  %v240 = vsel %vm232, %v200, 0.0
  %v241 = vsel %vm233, %v201, 0.0
  %v242 = vsel %vm234, %v202, 0.0
  %v243 = vsel %vm235, %v203, 0.0
  %v244 = vsel %vm236, %v204, 0.0
  %v245 = vsel %vm237, %v205, 0.0
  %v246 = vsel %vm238, %v206, 0.0
  %v247 = vsel %vm239, %v207, 0.0
  %v248 = vld [vmem:[%s2] sm:$0xff]
  %v249 = vadd.f32 %v240, %v241
  %v250 = vadd.f32 %v249, %v242
  %v251 = vadd.f32 %v250, %v243
  %v252 = vadd.f32 %v251, %v244
  %v253 = vadd.f32 %v252, %v245
  %v254 = vadd.f32 %v253, %v246
  %v255 = vadd.f32 %v254, %v247
  %256 = vadd.xlane.f32.xlu0 %v255
  %v257 = vpop.xlane.xlu0 %256
  %v258 = vrot.slane %v257, 4
  %v259 = vadd.f32 %v257, %v258
  %v260 = vrot.slane %v259, 2
  %v261 = vadd.f32 %v259, %v260
  %v262 = vrot.slane %v261, 1
  %v263 = vadd.f32 %v261, %v262
  %s264 = vtos %v263
  %v265 = vstv %s264
  %v266 = vadd.f32 %v248, %v265
  %267 = vst [vmem:[%s2] sm:$0xff] %v266
  // Predicated region
  $region14: #{bce_with_logits_loss.1} parent=0 // pred_check
    _
  $region15: #{bce_with_logits_loss.1} parent=0 // pred_check_branch
    %269 = sbr.rel (0) target = $region17
  $region16: #{bce_with_logits_loss.1} parent=0 // pred_region
    _
  $region17: #{bce_with_logits_loss.1} parent=0 // pred_fallthru
    _
  // Predicated region
  $region18: #{bce_with_logits_loss.1} parent=0 // pred_check
    _
  $region19: #{bce_with_logits_loss.1} parent=0 // pred_check_branch
    %271 = sbr.rel (0) target = $region21
  $region20: #{bce_with_logits_loss.1} parent=0 // pred_region
    _
  $region21: #{bce_with_logits_loss.1} parent=0 // pred_fallthru
    _

</llo_original>
